<compile_context>
chip_gen: v7x
topology: tpu7x:2x2x1
jax: 0.10.0
libtpu: 0.0.40
codegen_flags: <defaults>
</compile_context>

<pallas_src>
import functools

import jax
import jax.numpy as jnp
from jax.experimental import pallas as pl
from jax.experimental.pallas import tpu as pltpu

LANES = 128
SUBLANES = 8
SUB_BLOCK = SUBLANES * LANES            # 1024 elements
MAX_TILE_ROWS = 8192                    # 8192*128*4 B = 4 MiB per f32 input block
CHUNK_ROWS = 512                        # in-kernel accumulation slab (256 KiB f32)
VMEM_LIMIT_BYTES = 48 * 1024 * 1024     # 2 inputs x 2 bufs x 4 MiB + temps << 48 MiB


def _bce_sum_kernel(x_ref, t_ref, o_ref, acc_ref, *, tile_rows, chunk_rows,
                    tiles_per_part, total_tiles, rows_valid, needs_mask,
                    ragged_parts):
    p = pl.program_id(0)        # per-TensorCore partial sum ("parallel")
    i = pl.program_id(1)        # reduction over row tiles ("arbitrary")
    tile_idx = p * tiles_per_part + i

    @pl.when(i == 0)
    def _():
        acc_ref[...] = jnp.zeros_like(acc_ref)

    def accumulate_tile():
        n_chunks = tile_rows // chunk_rows

        def chunk_body(c, carry):
            off = pl.multiple_of(c * chunk_rows, chunk_rows)
            x = x_ref[pl.ds(off, chunk_rows), :].astype(jnp.float32)
            t = t_ref[pl.ds(off, chunk_rows), :].astype(jnp.float32)
            # PyTorch binary_cross_entropy: clamp each log term at -100; use
            # log1p(-x) (not log(1-x)) for precision when x ~ 0.
            log_p = jnp.maximum(jnp.log(x), -100.0)
            log_1mp = jnp.maximum(jnp.log1p(-x), -100.0)
            # == -(t*log_p + (1-t)*log_1mp), with one fewer multiply.
            loss = -(log_1mp + t * (log_p - log_1mp))
            if needs_mask:
                # Row-level mask of the ragged last tile (garbage rows past the end
                # of the bulk slab).  Row indices only -> no int32 overflow hazard.
                row = jax.lax.broadcasted_iota(jnp.int32, (chunk_rows, LANES), 0)
                valid = (tile_idx * tile_rows + off + row) < rows_valid
                loss = jnp.where(valid, loss, 0.0)
            # VPU-only vector accumulation into the (8, 128) partial sum.
            acc_ref[...] += loss.reshape(chunk_rows // SUBLANES, SUBLANES,
                                         LANES).sum(axis=0)
            return carry

        jax.lax.fori_loop(0, n_chunks, chunk_body, 0, unroll=True)

    if ragged_parts:
        # Odd tile count split over 2 parts: the clamped (redundant) last tile of
        # the second part is skipped; its finalize write below is still valid.
        pl.when(tile_idx < total_tiles)(accumulate_tile)
    else:
        accumulate_tile()

    @pl.when(i == pl.num_programs(1) - 1)
    def _():
        o_ref[0, 0] = jnp.sum(acc_ref[...])


def bce_loss(inputs, targets):
    """Mean BCE over all elements, matching F.binary_cross_entropy(reduction='mean')."""
    assert inputs.shape == targets.shape
    n = int(inputs.size)
    assert n > 0

    x = inputs.reshape(-1)
    t = targets.reshape(-1)

    n_bulk = (n // SUB_BLOCK) * SUB_BLOCK
    tail_sum = None

    if n_bulk == n:
        xb, tb = x, t                      # zero-copy: reshape to (rows,128) below
    elif n_bulk == 0:
        # Tiny input: pad to a single (8,128) tile.  x = t = 1 contributes exactly
        # zero loss, so no masking or epilogue is needed for the pad.
        pad = SUB_BLOCK - n
        xb = jnp.pad(x, (0, pad), constant_values=1)
        tb = jnp.pad(t, (0, pad), constant_values=1)
        n_bulk = SUB_BLOCK
    else:
        # Aligned bulk goes through the kernel; the <1024-element tail is summed by
        # a tiny plain-jnp epilogue (no full-array pad/rewrite of both operands).
        xb = jax.lax.slice(x, (0,), (n_bulk,))
        tb = jax.lax.slice(t, (0,), (n_bulk,))
        xt = x[n_bulk:].astype(jnp.float32)
        tt = t[n_bulk:].astype(jnp.float32)
        log_p = jnp.maximum(jnp.log(xt), -100.0)
        log_1mp = jnp.maximum(jnp.log1p(-xt), -100.0)
        tail_sum = jnp.sum(-(log_1mp + tt * (log_p - log_1mp)))

    rows = n_bulk // LANES                    # multiple of 8
    tile_rows = min(MAX_TILE_ROWS, rows)      # multiple of 8 (or == rows)
    total_tiles = -(-rows // tile_rows)

    # Unconditional 2-way split whenever there is more than one tile: each v7x
    # TensorCore reduces its half into its own partial; sequential (and harmless)
    # on single-core v5e / v6e.
    num_parts = 2 if total_tiles >= 2 else 1
    tiles_per_part = -(-total_tiles // num_parts)
    ragged_parts = num_parts * tiles_per_part != total_tiles

    needs_mask = (rows % tile_rows) != 0
    chunk_rows = CHUNK_ROWS if (tile_rows % CHUNK_ROWS == 0) else tile_rows

    x2 = xb.reshape(rows, LANES)
    t2 = tb.reshape(rows, LANES)

    kernel = functools.partial(
        _bce_sum_kernel,
        tile_rows=tile_rows,
        chunk_rows=chunk_rows,
        tiles_per_part=tiles_per_part,
        total_tiles=total_tiles,
        rows_valid=rows,
        needs_mask=needs_mask,
        ragged_parts=ragged_parts,
    )

    if ragged_parts:
        def block_index(p, i):
            return (jnp.minimum(p * tiles_per_part + i, total_tiles - 1), 0)
    else:
        def block_index(p, i):
            return (p * tiles_per_part + i, 0)

    in_spec = pl.BlockSpec((tile_rows, LANES), block_index)

    partials = pl.pallas_call(
        kernel,
        out_shape=jax.ShapeDtypeStruct((num_parts, 1), jnp.float32),
        grid_spec=pltpu.PrefetchScalarGridSpec(
            num_scalar_prefetch=0,
            grid=(num_parts, tiles_per_part),
            in_specs=[in_spec, in_spec],
            out_specs=pl.BlockSpec((1, 1), lambda p, i: (p, 0),
                                   memory_space=pltpu.SMEM),
            scratch_shapes=[pltpu.VMEM((SUBLANES, LANES), jnp.float32)],
        ),
        compiler_params=pltpu.CompilerParams(
            dimension_semantics=("parallel", "arbitrary"),
            vmem_limit_bytes=VMEM_LIMIT_BYTES),
    )(x2, t2)

    total = jnp.sum(partials)
    if tail_sum is not None:
        total = total + tail_sum
    return total / jnp.float32(n)


if __name__ == "__main__":
    key = jax.random.PRNGKey(0)
    k1, k2 = jax.random.split(key)
    # Small shape consistent with a segmentation-style BCE loss: (N, C, H, W)
    shape = (2, 4, 16, 16)
    inputs = jax.nn.sigmoid(jax.random.normal(k1, shape, dtype=jnp.float32))
    targets = (jax.random.uniform(k2, shape) > 0.5).astype(jnp.float32)

    loss = bce_loss(inputs, targets)
    jax.block_until_ready(loss)

    # Reference in plain JAX, matching PyTorch's clamped-log BCE (mean reduction).
    p_ = inputs.reshape(-1)
    t_ = targets.reshape(-1)
    ref = jnp.mean(-(t_ * jnp.maximum(jnp.log(p_), -100.0)
                     + (1.0 - t_) * jnp.maximum(jnp.log1p(-p_), -100.0)))
    assert jnp.allclose(loss, ref, rtol=1e-5, atol=1e-6), (loss, ref)

    print("KERNEL_OK")
</pallas_src>

<mosaic_0001>
module attributes {stable_mosaic.version = 11 : i64} {
  func.func @_bce_sum_kernel(%arg0: i32, %arg1: i32, %arg2: memref<16x128xf32, #tpu.memory_space<vmem>>, %arg3: memref<16x128xf32, #tpu.memory_space<vmem>>, %arg4: memref<1x1xf32, #tpu.memory_space<smem>>, %arg5: memref<8x128xf32, #tpu.memory_space<vmem>>) attributes {dimension_semantics = [#tpu.dimension_semantics<parallel>, #tpu.dimension_semantics<arbitrary>], iteration_bounds = array<i64: 1, 1>, scalar_prefetch = 0 : i64, scratch_operands = 1 : i64, tpu.core_type = #tpu.core_type<tc>, window_params = [{transform_indices = @transform_0, window_bounds = array<i64: 16, 128>}, {transform_indices = @transform_1, window_bounds = array<i64: 16, 128>}, {transform_indices = @transform_2, window_bounds = array<i64: 1, 1>}]} {
    %c0_i32 = arith.constant 0 : i32
    %0 = arith.cmpi eq, %arg1, %c0_i32 : i32
    %1 = arith.extui %0 : i1 to i32
    %c0_i32_0 = arith.constant 0 : i32
    %2 = arith.cmpi ne, %1, %c0_i32_0 : i32
    scf.if %2 {
      %cst_13 = arith.constant 0.000000e+00 : f32
      %30 = vector.broadcast %cst_13 : f32 to vector<8x128xf32>
      %c0_14 = arith.constant 0 : index
      %c0_15 = arith.constant 0 : index
      %31 = vector.load %arg5[%c0_14, %c0_15] : memref<8x128xf32, #tpu.memory_space<vmem>>, vector<8x128xf32>
      tpu.vector_store %arg5[%c0_14, %c0_15], %30 {strides = array<i32>} : memref<8x128xf32, #tpu.memory_space<vmem>>, vector<8x128xf32>,
    } else {
    }
    %c0_i32_1 = arith.constant 0 : i32
    %c16_i32 = arith.constant 16 : i32
    %3 = arith.muli %c0_i32_1, %c16_i32 : i32
    %4 = tpu.assume_multiple %3, 16 : i32
    %5 = arith.index_cast %4 : i32 to index
    %c0 = arith.constant 0 : index
    %6 = vector.load %arg2[%5, %c0] : memref<16x128xf32, #tpu.memory_space<vmem>>, vector<16x128xf32>
    %7 = arith.index_cast %4 : i32 to index
    %c0_2 = arith.constant 0 : index
    %8 = vector.load %arg3[%7, %c0_2] : memref<16x128xf32, #tpu.memory_space<vmem>>, vector<16x128xf32>
    %9 = math.log %6 : vector<16x128xf32>
    %cst = arith.constant -1.000000e+02 : f32
    %10 = vector.broadcast %cst : f32 to vector<16x128xf32>
    %11 = arith.maximumf %9, %10 : vector<16x128xf32>
    %cst_3 = arith.constant 0.000000e+00 : f32
    %12 = vector.broadcast %cst_3 : f32 to vector<16x128xf32>
    %13 = arith.subf %12, %6 : vector<16x128xf32>
    %14 = math.log1p %13 : vector<16x128xf32>
    %cst_4 = arith.constant -1.000000e+02 : f32
    %15 = vector.broadcast %cst_4 : f32 to vector<16x128xf32>
    %16 = arith.maximumf %14, %15 : vector<16x128xf32>
    %17 = arith.subf %11, %16 : vector<16x128xf32>
    %18 = arith.mulf %8, %17 : vector<16x128xf32>
    %19 = arith.addf %16, %18 : vector<16x128xf32>
    %cst_5 = arith.constant 0.000000e+00 : f32
    %20 = vector.broadcast %cst_5 : f32 to vector<16x128xf32>
    %21 = arith.subf %20, %19 : vector<16x128xf32>
    %c0_6 = arith.constant 0 : index
    %c0_7 = arith.constant 0 : index
    %22 = vector.load %arg5[%c0_6, %c0_7] : memref<8x128xf32, #tpu.memory_space<vmem>>, vector<8x128xf32>
    %23 = vector.shape_cast %21 : vector<16x128xf32> to vector<2x8x128xf32>
    %cst_8 = arith.constant dense<0.000000e+00> : vector<8x128xf32>
    %24 = vector.multi_reduction <add>, %23, %cst_8 [0] : vector<2x8x128xf32> to vector<8x128xf32>
    %25 = arith.addf %22, %24 : vector<8x128xf32>
    %c0_9 = arith.constant 0 : index
    %c0_10 = arith.constant 0 : index
    %26 = vector.load %arg5[%c0_9, %c0_10] : memref<8x128xf32, #tpu.memory_space<vmem>>, vector<8x128xf32>
    tpu.vector_store %arg5[%c0_9, %c0_10], %25 {strides = array<i32>} : memref<8x128xf32, #tpu.memory_space<vmem>>, vector<8x128xf32>,
    %c1_i32 = arith.constant 1 : i32
    %c0_i32_11 = arith.constant 0 : i32
    %27 = arith.cmpi eq, %arg1, %c0_i32_11 : i32
    %28 = arith.extui %27 : i1 to i32
    %c0_i32_12 = arith.constant 0 : i32
    %29 = arith.cmpi ne, %28, %c0_i32_12 : i32
    scf.if %29 {
      %c0_13 = arith.constant 0 : index
      %c0_14 = arith.constant 0 : index
      %30 = vector.load %arg5[%c0_13, %c0_14] : memref<8x128xf32, #tpu.memory_space<vmem>>, vector<8x128xf32>
      %31 = vector.shape_cast %30 : vector<8x128xf32> to vector<1x8x128xf32>
      %cst_15 = arith.constant dense<0.000000e+00> : vector<1xf32>
      %32 = vector.multi_reduction <add>, %31, %cst_15 [1, 2] : vector<1x8x128xf32> to vector<1xf32>
      %33 = vector.shape_cast %32 : vector<1xf32> to vector<1x1x1xf32>
      %34 = vector.extract %33[0, 0, 0] : f32 from vector<1x1x1xf32>
      %c0_16 = arith.constant 0 : index
      %c0_17 = arith.constant 0 : index
      %35 = memref.load %arg4[%c0_16, %c0_17] : memref<1x1xf32, #tpu.memory_space<smem>>
      memref.store %34, %arg4[%c0_16, %c0_17] : memref<1x1xf32, #tpu.memory_space<smem>>
    } else {
    }
    return
  }
  func.func @transform_0(%arg0: i32, %arg1: i32) -> (i32, i32) {
    %c1_i32 = arith.constant 1 : i32
    %0 = arith.muli %arg0, %c1_i32 : i32
    %1 = arith.addi %0, %arg1 : i32
    %c0_i32 = arith.constant 0 : i32
    %c0_i32_0 = arith.constant 0 : i32
    return %1, %c0_i32 : i32, i32
  }
  func.func @transform_1(%arg0: i32, %arg1: i32) -> (i32, i32) {
    %c1_i32 = arith.constant 1 : i32
    %0 = arith.muli %arg0, %c1_i32 : i32
    %1 = arith.addi %0, %arg1 : i32
    %c0_i32 = arith.constant 0 : i32
    %c0_i32_0 = arith.constant 0 : i32
    return %1, %c0_i32 : i32, i32
  }
  func.func @transform_2(%arg0: i32, %arg1: i32) -> (i32, i32) {
    %c0_i32 = arith.constant 0 : i32
    %c0_i32_0 = arith.constant 0 : i32
    return %arg0, %c0_i32 : i32, i32
  }
}

</mosaic_0001>

<llo_original>
// kernel: tpu_custom_call.1
$region0: #{tpu_custom_call.1}
  #allocation0 [shape = 'u32[]', space=smem, size = 0x4, offset = 0x4, fixed_abs, tag = 'smem constant byte address 0x4 - core index']
  #allocation1 [shape = 'u32[144,128]{1,0:T(1,128)}', space=vmem, size = 0x12000, scoped, tag = 'internal scratch']
  #allocation2 [shape = 'f32[8,128]{1,0:T(8,128)}', space=vmem, size = 0x1000, scoped, tag = 'scratch operand']
  %s0 = inlined_call_operand.hbm [shape: f32[16,128], index: 0, kind: input, shape index: {}]
  %s1 = inlined_call_operand.hbm [shape: f32[16,128], index: 1, kind: input, shape index: {}]
  %s2 = inlined_call_operand.hbm [shape: f32[1,1], index: 2, kind: output, shape index: {}]
  %s3 = sld [smem:[#allocation0]]
  $region34: #{tpu_custom_call.1} parent=0
    _
  %s5 = ssub.s32 1, %s3
  %s6 = scalar_select 0, %s5, %s3
  $region1: #{tpu_custom_call.1} parent=0
    #allocation3 [shape = 'u8[8192]{0}', space=vmem, size = 0x2000, scoped, tag = 'input window, operand 0, single buffered']
    #allocation4 [shape = 's32[1]{0}', space=sflag, size = 0x4, scoped, tag = 'scoped memory for tpu_custom_call.1']
    #allocation5 [shape = 's32[1]{0}', space=sflag, size = 0x4, scoped, tag = 'scoped memory for tpu_custom_call.1']
    #allocation6 [shape = 'u8[8192]{0}', space=vmem, size = 0x2000, scoped, tag = 'input window, operand 1, single buffered']
    #allocation7 [shape = 's32[1]{0}', space=sflag, size = 0x4, scoped, tag = 'scoped memory for tpu_custom_call.1']
    #allocation8 [shape = 'u8[512]{0}', space=smem, size = 0x200, scoped, tag = 'output window, operand 0, single buffered']
    %7 = vsyncpa [#allocation4], 0
    %8 = vsyncpa [#allocation7], 0
    %9 = vsyncpa [#allocation5], 0
    // Predicated region
    $region2: #{tpu_custom_call.1} parent=1 // pred_check
      _
    $region3: #{tpu_custom_call.1} parent=1 // pred_check_branch
      %11 = sbr.rel (0) target = $region5
    $region4: #{tpu_custom_call.1} parent=1 // pred_region
      %s12 = sadd.s32 0, 0
      %s13 = smul.u32 2, %s12
      %s15 = ssub.s32 256, 256
      %16 = vsyncadd [#allocation4], %s15
      %s17 = smul.addr %s13, 128
      %s18 = scalar_lea.hbm %s0, %s17
      %s19 = sshll.u32 [#allocation3], 4
      %s20 = int_to_ptr.vmem [resolvable:$true] %s19
      %25 = dma.hbm_to_vmem [thread:$0]  %s18, 256, %s20, [#allocation4], 128, 128, 8
    $region5: #{tpu_custom_call.1} parent=1 // pred_fallthru
      _
    // Predicated region
    $region6: #{tpu_custom_call.1} parent=1 // pred_check
      _
    $region7: #{tpu_custom_call.1} parent=1 // pred_check_branch
      %27 = sbr.rel (0) target = $region9
    $region8: #{tpu_custom_call.1} parent=1 // pred_region
      %s28 = sadd.s32 0, 0
      %s29 = smul.u32 2, %s28
      %s31 = ssub.s32 256, 256
      %32 = vsyncadd [#allocation7], %s31
      %s33 = smul.addr %s29, 128
      %s34 = scalar_lea.hbm %s1, %s33
      %s35 = sshll.u32 [#allocation6], 4
      %s36 = int_to_ptr.vmem [resolvable:$true] %s35
      %41 = dma.hbm_to_vmem [thread:$0]  %s34, 256, %s36, [#allocation7], 128, 128, 8
    $region9: #{tpu_custom_call.1} parent=1 // pred_fallthru
      _
    // Predicated region
    $region10: #{tpu_custom_call.1} parent=1 // pred_check
      _
    $region11: #{tpu_custom_call.1} parent=1 // pred_check_branch
      %43 = sbr.rel (0) target = $region13
    $region12: #{tpu_custom_call.1} parent=1 // pred_region
      %44 = dma.done [#allocation4], 256
    $region13: #{tpu_custom_call.1} parent=1 // pred_fallthru
      _
    // Predicated region
    $region14: #{tpu_custom_call.1} parent=1 // pred_check
      _
    $region15: #{tpu_custom_call.1} parent=1 // pred_check_branch
      %46 = sbr.rel (0) target = $region17
    $region16: #{tpu_custom_call.1} parent=1 // pred_region
      %47 = dma.done [#allocation7], 256
    $region17: #{tpu_custom_call.1} parent=1 // pred_fallthru
      _
    %s48 = sadd.s32 0, 0
    %s49 = smul.u32 2, %s48
    %s50 = sadd.s32 0, 0
    %s51 = smul.u32 2, %s50
    %p52 = scmp.eq.s32.totalorder 0, 0
    // Predicated region
    $region18: #{tpu_custom_call.1} parent=1 // pred_check
      %p53 = pneg %p52
    $region19: #{tpu_custom_call.1} parent=1 // pred_check_branch
      %55 = sbr.rel (%p53) target = $region21
    $region20: #{tpu_custom_call.1} parent=1 // pred_region
      %56 = vst [vmem:[#allocation2] sm:$0xff] 0.0
    $region21: #{tpu_custom_call.1} parent=1 // pred_fallthru
      _
    %v57 = vld [vmem:[#allocation3] sm:$0xff]
    %v58 = vld [vmem:[#allocation3 + $0x8] sm:$0xff]
    %v59 = vld [vmem:[#allocation6] sm:$0xff]
    %v60 = vld [vmem:[#allocation6 + $0x8] sm:$0xff]
    %v61 = vlog2.pop %v57
    %v62 = vmul.f32 %v61, 0.6931472
    %v63 = vlog2.pop %v58
    %v64 = vmul.f32 %v63, 0.6931472
    %v65 = vmax.f32 %v62, -100.0
    %v66 = vmax.f32 %v64, -100.0
    %v67 = vsub.f32 0.0, %v57
    %v68 = vsub.f32 0.0, %v58
    %v69 = vadd.f32 %v67, 1.0
    %v70 = vlog2.pop %v69
    %v71 = vmul.f32 %v70, 0.6931472
    %v72 = vmul.f32 -0.5, %v67
    %v73 = vadd.f32 %v72, 1.0
    %v74 = vmul.f32 %v73, %v67
    %v75 = vand.u32 2147483647, %v67
    %vm76 = vcmp.lt.f32.partialorder %v75, 0.0004427343
    %v77 = vsel %vm76, %v74, %v71
    %v78 = vadd.f32 %v68, 1.0
    %v79 = vlog2.pop %v78
    %v80 = vmul.f32 %v79, 0.6931472
    %v81 = vmul.f32 -0.5, %v68
    %v82 = vadd.f32 %v81, 1.0
    %v83 = vmul.f32 %v82, %v68
    %v84 = vand.u32 2147483647, %v68
    %vm85 = vcmp.lt.f32.partialorder %v84, 0.0004427343
    %v86 = vsel %vm85, %v83, %v80
    %v87 = vmax.f32 %v77, -100.0
    %v88 = vmax.f32 %v86, -100.0
    %v89 = vsub.f32 %v65, %v87
    %v90 = vsub.f32 %v66, %v88
    %v91 = vmul.f32 %v59, %v89
    %v92 = vmul.f32 %v60, %v90
    %v93 = vadd.f32 %v87, %v91
    %v94 = vadd.f32 %v88, %v92
    %v95 = vsub.f32 0.0, %v93
    %v96 = vsub.f32 0.0, %v94
    %v97 = vld [vmem:[#allocation2] sm:$0xff]
    %v98 = vadd.f32 %v95, %v96
    %v99 = vadd.f32 %v97, %v98
    %100 = vst [vmem:[#allocation2] sm:$0xff] %v99
    // Predicated region
    $region22: #{tpu_custom_call.1} parent=1 // pred_check
      %p101 = pneg %p52
    $region23: #{tpu_custom_call.1} parent=1 // pred_check_branch
      %103 = sbr.rel (%p101) target = $region25
    $region24: #{tpu_custom_call.1} parent=1 // pred_region
      %v104 = vld [vmem:[#allocation2] sm:$0xff]
      %105 = vadd.xlane.f32.xlu0 %v104
      %v106 = vpop.xlane.xlu0 %105
      %v107 = vrot.slane %v106, 4
      %v108 = vadd.f32 %v106, %v107
      %v109 = vrot.slane %v108, 2
      %v110 = vadd.f32 %v108, %v109
      %v111 = vrot.slane %v110, 1
      %v112 = vadd.f32 %v110, %v111
      %s113 = vtos %v112
      %s114 = scalar_lea.smem [#allocation8], 0
      %115 = sst [smem:[%s114]] %s113
    $region25: #{tpu_custom_call.1} parent=1 // pred_fallthru
      _
    // Predicated region
    $region26: #{tpu_custom_call.1} parent=1 // pred_check
      _
    $region27: #{tpu_custom_call.1} parent=1 // pred_check_branch
      %117 = sbr.rel (0) target = $region29
    $region28: #{tpu_custom_call.1} parent=1 // pred_region
      %s119 = ssub.s32 16, 16
      %120 = vsyncadd [#allocation5], %s119
      %123 = dma.smem_to_hbm [#allocation8], 16, %s2, [#allocation5]
    $region29: #{tpu_custom_call.1} parent=1 // pred_fallthru
      _
    // Predicated region
    $region30: #{tpu_custom_call.1} parent=1 // pred_check
      _
    $region31: #{tpu_custom_call.1} parent=1 // pred_check_branch
      %125 = sbr.rel (0) target = $region33
    $region32: #{tpu_custom_call.1} parent=1 // pred_region
      %126 = dma.done [#allocation5], 16
    $region33: #{tpu_custom_call.1} parent=1 // pred_fallthru
      _
    %127 = sfence
    %128 = vsyncpa [#allocation4], 1
    %129 = vsyncpa [#allocation7], 1
    %130 = vsyncpa [#allocation5], 1

</llo_original>
